<compile_context>
chip_gen: v7x
topology: tpu7x:2x2x1
jax: 0.10.0
libtpu: 0.0.40
codegen_flags: <defaults>
</compile_context>

<pallas_src>
import functools

import jax
import jax.numpy as jnp
from jax import lax
from jax.experimental import pallas as pl
from jax.experimental.pallas import tpu as pltpu

_LANES = 128            # vreg lane width
_MAX_BLOCK_ROWS = 2048  # rows/block: map block = 3*2048*128*4B = 3 MiB, mask = 1 MiB
_NSPLIT = 2             # leading "parallel" grid axis (2 TCs on v7x; serial elsewhere)


def _mask_loss_kernel(wm_ref, map_ref, out_ref, acc_ref, *,
                      t: float, n: int, tr: int, inner: int):
    """Processes one (tr, 128) tile of one spatial split.

    wm_ref:  (tr, 128)    VMEM
    map_ref: (3, tr, 128) VMEM
    out_ref: (1, 1)       SMEM  (this split's partial sum, written at last inner step)
    acc_ref: (1,)         SMEM  scratch accumulator (persists across inner steps)
    """
    c = pl.program_id(0)
    i = pl.program_id(1)

    @pl.when(i == 0)
    def _init():
        acc_ref[0] = jnp.float32(0.0)

    # Load channels individually (keeps live-vreg count low vs. materializing (3,tr,128)).
    m0 = map_ref[0].astype(jnp.float32)
    m1 = map_ref[1].astype(jnp.float32)
    m2 = map_ref[2].astype(jnp.float32)
    wm = wm_ref[...].astype(jnp.float32)

    lum = 0.114 * m0 + 0.587 * m1 + 0.299 * m2
    # Fused threshold + L1 term: |wm - gt| with gt = (lum > t).
    term = jnp.where(lum > t, jnp.abs(wm - 1.0), jnp.abs(wm))

    # Mask out padded lanes / out-of-bounds rows / phantom trailing blocks, so the
    # wrapper never has to materialize a padded copy of the inputs.
    blk = c * inner + i
    base = blk * (tr * _LANES)          # global element offset of this block
    flat_iota = (lax.broadcasted_iota(jnp.int32, (tr, _LANES), 0) * _LANES
                 + lax.broadcasted_iota(jnp.int32, (tr, _LANES), 1))
    term = jnp.where(base + flat_iota < n, term, 0.0)

    acc_ref[0] += jnp.sum(term)

    @pl.when(i == pl.num_programs(1) - 1)
    def _finalize():
        out_ref[0, 0] = acc_ref[0]


def mask_loss(weight_mask: jax.Array, map_img: jax.Array, t: float = 0.1) -> jax.Array:
    """weight_mask: [1, 1, H, W], map_img: [1, 3, H, W] -> scalar f32 loss.

    Inputs may be f32 or bf16 (they are cast to f32 inside the kernel).
    """
    assert map_img.ndim == 4 and map_img.shape[0] == 1 and map_img.shape[1] == 3
    assert weight_mask.ndim == 4 and weight_mask.shape[0] == 1 and weight_mask.shape[1] == 1
    H, W = map_img.shape[2], map_img.shape[3]
    assert weight_mask.shape[2] == H and weight_mask.shape[3] == W

    n = H * W
    wm_flat = weight_mask.reshape(n)        # free reshape (contiguous)
    map_flat = map_img.reshape(3, n)        # free reshape (contiguous)

    # Lane-dense 2-D view.  Pad (one extra copy) only when n is not already a
    # multiple of the lane width; row-tail / padding is masked in-kernel.
    rows = -(-n // _LANES)                  # ceil-div
    if rows * _LANES != n:
        pad = rows * _LANES - n
        wm_flat = jnp.pad(wm_flat, (0, pad))
        map_flat = jnp.pad(map_flat, ((0, 0), (0, pad)))
    wm2 = wm_flat.reshape(rows, _LANES)
    map2 = map_flat.reshape(3, rows, _LANES)

    # Row tile: whole array if it fits one block (block == full dim, always legal),
    # else 2048-row blocks (divisible by 8); the last block may be partial.
    tr = rows if rows <= _MAX_BLOCK_ROWS else _MAX_BLOCK_ROWS
    nblocks = -(-rows // tr)
    nsplit = min(_NSPLIT, nblocks)
    inner = -(-nblocks // nsplit)

    def wm_idx(c, i):
        # Clamp phantom trailing blocks (their contribution is masked to 0 in-kernel).
        return (jnp.minimum(c * inner + i, nblocks - 1), 0)

    def map_idx(c, i):
        return (0, jnp.minimum(c * inner + i, nblocks - 1), 0)

    kernel = functools.partial(_mask_loss_kernel, t=float(t), n=n, tr=tr, inner=inner)

    partials = pl.pallas_call(
        kernel,
        out_shape=jax.ShapeDtypeStruct((nsplit, 1), jnp.float32),
        grid_spec=pltpu.PrefetchScalarGridSpec(
            num_scalar_prefetch=0,
            grid=(nsplit, inner),
            in_specs=[
                pl.BlockSpec((tr, _LANES), wm_idx),
                pl.BlockSpec((3, tr, _LANES), map_idx),
            ],
            out_specs=pl.BlockSpec((1, 1), lambda c, i: (c, 0),
                                   memory_space=pltpu.SMEM),
            scratch_shapes=[pltpu.SMEM((1,), jnp.float32)],
        ),
        compiler_params=pltpu.CompilerParams(
            dimension_semantics=("parallel", "arbitrary"),
            vmem_limit_bytes=32 * 1024 * 1024,
        ),
    )(wm2, map2)

    # Combine per-split partial sums and apply the mean once (single multiply).
    return jnp.sum(partials) * jnp.float32(1.0 / n)


def mask_loss_ref(weight_mask, map_img, t=0.1):
    """Pure-JAX reference matching the PyTorch forward."""
    lum = (0.114 * map_img[0, 0] + 0.587 * map_img[0, 1] + 0.299 * map_img[0, 2])
    gt = jnp.where(lum > t, 1.0, 0.0)
    return jnp.mean(jnp.abs(weight_mask[0, 0] - gt))


if __name__ == "__main__":
    key = jax.random.PRNGKey(0)
    k1, k2, k3, k4, k5, k6 = jax.random.split(key, 6)

    # Case 1: small size, H*W multiple of 128 (zero-copy path, single block).
    H, W = 16, 16
    wm1 = jax.random.uniform(k1, (1, 1, H, W), dtype=jnp.float32)
    mp1 = jax.random.uniform(k2, (1, 3, H, W), dtype=jnp.float32)
    loss1 = jax.block_until_ready(mask_loss(wm1, mp1, t=0.1))
    ref1 = mask_loss_ref(wm1, mp1, t=0.1)
    assert jnp.allclose(loss1, ref1, atol=1e-5, rtol=1e-5), (loss1, ref1)

    # Case 2: H*W not a multiple of 128 (exercises the lane-pad + in-kernel mask path).
    H2, W2 = 20, 24
    wm2 = jax.random.uniform(k3, (1, 1, H2, W2), dtype=jnp.float32)
    mp2 = jax.random.uniform(k4, (1, 3, H2, W2), dtype=jnp.float32)
    loss2 = jax.block_until_ready(mask_loss(wm2, mp2, t=0.1))
    ref2 = mask_loss_ref(wm2, mp2, t=0.1)
    assert jnp.allclose(loss2, ref2, atol=1e-5, rtol=1e-5), (loss2, ref2)

    # Case 3: rows > block size (exercises the 2-split grid, a partially
    # out-of-bounds final block and the in-kernel row mask).
    H3, W3 = 520, 512
    wm3 = jax.random.uniform(k5, (1, 1, H3, W3), dtype=jnp.float32)
    mp3 = jax.random.uniform(k6, (1, 3, H3, W3), dtype=jnp.float32)
    loss3 = jax.block_until_ready(mask_loss(wm3, mp3, t=0.1))
    ref3 = mask_loss_ref(wm3, mp3, t=0.1)
    assert jnp.allclose(loss3, ref3, atol=1e-5, rtol=1e-5), (loss3, ref3)

    print("KERNEL_OK")
</pallas_src>

<mosaic_0001>
module attributes {stable_mosaic.version = 11 : i64} {
  func.func @_mask_loss_kernel(%arg0: i32, %arg1: i32, %arg2: memref<2x128xf32, #tpu.memory_space<vmem>>, %arg3: memref<3x2x128xf32, #tpu.memory_space<vmem>>, %arg4: memref<1x1xf32, #tpu.memory_space<smem>>, %arg5: memref<1xf32, #tpu.memory_space<smem>>) attributes {dimension_semantics = [#tpu.dimension_semantics<parallel>, #tpu.dimension_semantics<arbitrary>], iteration_bounds = array<i64: 1, 1>, scalar_prefetch = 0 : i64, scratch_operands = 1 : i64, tpu.core_type = #tpu.core_type<tc>, window_params = [{transform_indices = @transform_0, window_bounds = array<i64: 2, 128>}, {transform_indices = @transform_1, window_bounds = array<i64: 3, 2, 128>}, {transform_indices = @transform_2, window_bounds = array<i64: 1, 1>}]} {
    %c0_i32 = arith.constant 0 : i32
    %0 = arith.cmpi eq, %arg1, %c0_i32 : i32
    %1 = arith.extui %0 : i1 to i32
    %c0_i32_0 = arith.constant 0 : i32
    %2 = arith.cmpi ne, %1, %c0_i32_0 : i32
    scf.if %2 {
      %cst_20 = arith.constant 0.000000e+00 : f32
      %c0_21 = arith.constant 0 : index
      %49 = memref.load %arg5[%c0_21] : memref<1xf32, #tpu.memory_space<smem>>
      memref.store %cst_20, %arg5[%c0_21] : memref<1xf32, #tpu.memory_space<smem>>
    } else {
    }
    %c0 = arith.constant 0 : index
    %c0_1 = arith.constant 0 : index
    %c0_2 = arith.constant 0 : index
    %3 = vector.load %arg3[%c0, %c0_1, %c0_2] : memref<3x2x128xf32, #tpu.memory_space<vmem>>, vector<1x2x128xf32>
    %4 = vector.shape_cast %3 : vector<1x2x128xf32> to vector<2x128xf32>
    %c1 = arith.constant 1 : index
    %c0_3 = arith.constant 0 : index
    %c0_4 = arith.constant 0 : index
    %5 = vector.load %arg3[%c1, %c0_3, %c0_4] : memref<3x2x128xf32, #tpu.memory_space<vmem>>, vector<1x2x128xf32>
    %6 = vector.shape_cast %5 : vector<1x2x128xf32> to vector<2x128xf32>
    %c2 = arith.constant 2 : index
    %c0_5 = arith.constant 0 : index
    %c0_6 = arith.constant 0 : index
    %7 = vector.load %arg3[%c2, %c0_5, %c0_6] : memref<3x2x128xf32, #tpu.memory_space<vmem>>, vector<1x2x128xf32>
    %8 = vector.shape_cast %7 : vector<1x2x128xf32> to vector<2x128xf32>
    %c0_7 = arith.constant 0 : index
    %c0_8 = arith.constant 0 : index
    %9 = vector.load %arg2[%c0_7, %c0_8] : memref<2x128xf32, #tpu.memory_space<vmem>>, vector<2x128xf32>
    %cst = arith.constant 1.140000e-01 : f32
    %10 = vector.broadcast %cst : f32 to vector<2x128xf32>
    %11 = arith.mulf %10, %4 : vector<2x128xf32>
    %cst_9 = arith.constant 5.870000e-01 : f32
    %12 = vector.broadcast %cst_9 : f32 to vector<2x128xf32>
    %13 = arith.mulf %12, %6 : vector<2x128xf32>
    %14 = arith.addf %11, %13 : vector<2x128xf32>
    %cst_10 = arith.constant 2.990000e-01 : f32
    %15 = vector.broadcast %cst_10 : f32 to vector<2x128xf32>
    %16 = arith.mulf %15, %8 : vector<2x128xf32>
    %17 = arith.addf %14, %16 : vector<2x128xf32>
    %cst_11 = arith.constant 1.000000e-01 : f32
    %18 = vector.broadcast %cst_11 : f32 to vector<2x128xf32>
    %19 = arith.cmpf ogt, %17, %18 : vector<2x128xf32>
    %cst_12 = arith.constant 1.000000e+00 : f32
    %20 = vector.broadcast %cst_12 : f32 to vector<2x128xf32>
    %21 = arith.subf %9, %20 : vector<2x128xf32>
    %22 = math.absf %21 : vector<2x128xf32>
    %23 = math.absf %9 : vector<2x128xf32>
    %24 = arith.select %19, %22, %23 : vector<2x128xi1>, vector<2x128xf32>
    %c1_i32 = arith.constant 1 : i32
    %25 = arith.muli %arg0, %c1_i32 : i32
    %26 = arith.addi %25, %arg1 : i32
    %c256_i32 = arith.constant 256 : i32
    %27 = arith.muli %26, %c256_i32 : i32
    %28 = tpu.iota {dimensions = array<i32: 0>} : vector<2x128xi32>
    %c128_i32 = arith.constant 128 : i32
    %29 = vector.broadcast %c128_i32 : i32 to vector<2x128xi32>
    %30 = arith.muli %28, %29 : vector<2x128xi32>
    %31 = tpu.iota {dimensions = array<i32: 1>} : vector<2x128xi32>
    %32 = arith.addi %30, %31 : vector<2x128xi32>
    %33 = vector.broadcast %27 : i32 to vector<2x128xi32>
    %34 = arith.addi %33, %32 : vector<2x128xi32>
    %c256_i32_13 = arith.constant 256 : i32
    %35 = vector.broadcast %c256_i32_13 : i32 to vector<2x128xi32>
    %36 = arith.cmpi slt, %34, %35 : vector<2x128xi32>
    %cst_14 = arith.constant 0.000000e+00 : f32
    %37 = vector.broadcast %cst_14 : f32 to vector<2x128xf32>
    %38 = arith.select %36, %24, %37 : vector<2x128xi1>, vector<2x128xf32>
    %c0_15 = arith.constant 0 : index
    %39 = memref.load %arg5[%c0_15] : memref<1xf32, #tpu.memory_space<smem>>
    %40 = vector.shape_cast %38 : vector<2x128xf32> to vector<1x2x128xf32>
    %cst_16 = arith.constant dense<0.000000e+00> : vector<1xf32>
    %41 = vector.multi_reduction <add>, %40, %cst_16 [1, 2] : vector<1x2x128xf32> to vector<1xf32>
    %42 = vector.shape_cast %41 : vector<1xf32> to vector<1x1x1xf32>
    %43 = vector.extract %42[0, 0, 0] : f32 from vector<1x1x1xf32>
    %44 = arith.addf %39, %43 : f32
    %c0_17 = arith.constant 0 : index
    %45 = memref.load %arg5[%c0_17] : memref<1xf32, #tpu.memory_space<smem>>
    memref.store %44, %arg5[%c0_17] : memref<1xf32, #tpu.memory_space<smem>>
    %c0_i32_18 = arith.constant 0 : i32
    %46 = arith.cmpi eq, %arg1, %c0_i32_18 : i32
    %47 = arith.extui %46 : i1 to i32
    %c0_i32_19 = arith.constant 0 : i32
    %48 = arith.cmpi ne, %47, %c0_i32_19 : i32
    scf.if %48 {
      %c0_20 = arith.constant 0 : index
      %49 = memref.load %arg5[%c0_20] : memref<1xf32, #tpu.memory_space<smem>>
      %c0_21 = arith.constant 0 : index
      %c0_22 = arith.constant 0 : index
      %50 = memref.load %arg4[%c0_21, %c0_22] : memref<1x1xf32, #tpu.memory_space<smem>>
      memref.store %49, %arg4[%c0_21, %c0_22] : memref<1x1xf32, #tpu.memory_space<smem>>
    } else {
    }
    return
  }
  func.func @transform_0(%arg0: i32, %arg1: i32) -> (i32, i32) {
    %c1_i32 = arith.constant 1 : i32
    %0 = arith.muli %arg0, %c1_i32 : i32
    %1 = arith.addi %0, %arg1 : i32
    %c0_i32 = arith.constant 0 : i32
    %2 = arith.minsi %1, %c0_i32 : i32
    %c0_i32_0 = arith.constant 0 : i32
    %c0_i32_1 = arith.constant 0 : i32
    return %2, %c0_i32_0 : i32, i32
  }
  func.func @transform_1(%arg0: i32, %arg1: i32) -> (i32, i32, i32) {
    %c1_i32 = arith.constant 1 : i32
    %0 = arith.muli %arg0, %c1_i32 : i32
    %1 = arith.addi %0, %arg1 : i32
    %c0_i32 = arith.constant 0 : i32
    %2 = arith.minsi %1, %c0_i32 : i32
    %c0_i32_0 = arith.constant 0 : i32
    %c0_i32_1 = arith.constant 0 : i32
    %c0_i32_2 = arith.constant 0 : i32
    return %c0_i32_0, %2, %c0_i32_1 : i32, i32, i32
  }
  func.func @transform_2(%arg0: i32, %arg1: i32) -> (i32, i32) {
    %c0_i32 = arith.constant 0 : i32
    %c0_i32_0 = arith.constant 0 : i32
    return %arg0, %c0_i32 : i32, i32
  }
}

</mosaic_0001>

<llo_original>
// kernel: tpu_custom_call.1
$region0: #{tpu_custom_call.1}
  #allocation0 [shape = 'u32[]', space=smem, size = 0x4, offset = 0x4, fixed_abs, tag = 'smem constant byte address 0x4 - core index']
  #allocation1 [shape = 'u32[144,128]{1,0:T(1,128)}', space=vmem, size = 0x12000, scoped, tag = 'internal scratch']
  #allocation2 [shape = 'f32[1]{0:T(128)}', space=smem, size = 0x200, scoped, tag = 'scratch operand']
  %s0 = inlined_call_operand.hbm [shape: f32[2,128], index: 0, kind: input, shape index: {}]
  %s1 = inlined_call_operand.hbm [shape: f32[3,2,128], index: 1, kind: input, shape index: {}]
  %s2 = inlined_call_operand.hbm [shape: f32[1,1], index: 2, kind: output, shape index: {}]
  %s3 = sld [smem:[#allocation0]]
  $region34: #{tpu_custom_call.1} parent=0
    _
  %s5 = ssub.s32 1, %s3
  %s6 = scalar_select 0, %s5, %s3
  $region1: #{tpu_custom_call.1} parent=0
    #allocation3 [shape = 'u8[1024]{0}', space=vmem, size = 0x400, scoped, tag = 'input window, operand 0, single buffered']
    #allocation4 [shape = 's32[1]{0}', space=sflag, size = 0x4, scoped, tag = 'scoped memory for tpu_custom_call.1']
    #allocation5 [shape = 's32[1]{0}', space=sflag, size = 0x4, scoped, tag = 'scoped memory for tpu_custom_call.1']
    #allocation6 [shape = 'u8[3072]{0}', space=vmem, size = 0xc00, scoped, tag = 'input window, operand 1, single buffered']
    #allocation7 [shape = 's32[1]{0}', space=sflag, size = 0x4, scoped, tag = 'scoped memory for tpu_custom_call.1']
    #allocation8 [shape = 'u8[512]{0}', space=smem, size = 0x200, scoped, tag = 'output window, operand 0, single buffered']
    %7 = vsyncpa [#allocation4], 0
    %8 = vsyncpa [#allocation7], 0
    %9 = vsyncpa [#allocation5], 0
    // Predicated region
    $region2: #{tpu_custom_call.1} parent=1 // pred_check
      _
    $region3: #{tpu_custom_call.1} parent=1 // pred_check_branch
      %11 = sbr.rel (0) target = $region5
    $region4: #{tpu_custom_call.1} parent=1 // pred_region
      %s12 = sadd.s32 0, 0
      %p13 = scmp.lt.s32.totalorder %s12, 0
      %s14 = scalar_select %p13, %s12, 0
      %s16 = ssub.s32 32, 32
      %17 = vsyncadd [#allocation4], %s16
      %s18 = smul.addr %s14, 32
      %s19 = scalar_lea.hbm %s0, %s18
      %s21 = sshll.u32 [#allocation3], 4
      %s22 = int_to_ptr.vmem [resolvable:$true] %s21
      %24 = dma.hbm_to_vmem [thread:$0]  %s19, 32, %s22, [#allocation4]
    $region5: #{tpu_custom_call.1} parent=1 // pred_fallthru
      _
    // Predicated region
    $region6: #{tpu_custom_call.1} parent=1 // pred_check
      _
    $region7: #{tpu_custom_call.1} parent=1 // pred_check_branch
      %26 = sbr.rel (0) target = $region9
    $region8: #{tpu_custom_call.1} parent=1 // pred_region
      %s27 = sadd.s32 0, 0
      %p28 = scmp.lt.s32.totalorder %s27, 0
      %s29 = scalar_select %p28, %s27, 0
      %s31 = ssub.s32 96, 96
      %32 = vsyncadd [#allocation7], %s31
      %s33 = smul.addr %s29, 32
      %s34 = scalar_lea.hbm %s1, %s33
      %s35 = sshll.u32 [#allocation6], 4
      %s36 = int_to_ptr.vmem [resolvable:$true] %s35
      %41 = dma.hbm_to_vmem [thread:$0]  %s34, 96, %s36, [#allocation7], 32, 32, 2
    $region9: #{tpu_custom_call.1} parent=1 // pred_fallthru
      _
    // Predicated region
    $region10: #{tpu_custom_call.1} parent=1 // pred_check
      _
    $region11: #{tpu_custom_call.1} parent=1 // pred_check_branch
      %43 = sbr.rel (0) target = $region13
    $region12: #{tpu_custom_call.1} parent=1 // pred_region
      %44 = dma.done [#allocation4], 32
    $region13: #{tpu_custom_call.1} parent=1 // pred_fallthru
      _
    // Predicated region
    $region14: #{tpu_custom_call.1} parent=1 // pred_check
      _
    $region15: #{tpu_custom_call.1} parent=1 // pred_check_branch
      %46 = sbr.rel (0) target = $region17
    $region16: #{tpu_custom_call.1} parent=1 // pred_region
      %47 = dma.done [#allocation7], 96
    $region17: #{tpu_custom_call.1} parent=1 // pred_fallthru
      _
    %s48 = sadd.s32 0, 0
    %p49 = scmp.lt.s32.totalorder %s48, 0
    %s50 = scalar_select %p49, %s48, 0
    %s51 = sadd.s32 0, 0
    %p52 = scmp.lt.s32.totalorder %s51, 0
    %s53 = scalar_select %p52, %s51, 0
    %p54 = scmp.eq.s32.totalorder 0, 0
    // Predicated region
    $region18: #{tpu_custom_call.1} parent=1 // pred_check
      %p55 = pneg %p54
    $region19: #{tpu_custom_call.1} parent=1 // pred_check_branch
      %57 = sbr.rel (%p55) target = $region21
    $region20: #{tpu_custom_call.1} parent=1 // pred_region
      %s58 = scalar_lea.smem [#allocation2], 0
      %59 = sst [smem:[%s58]] 0.0
    $region21: #{tpu_custom_call.1} parent=1 // pred_fallthru
      _
    %v60 = vld [vmem:[#allocation6] sm:$0x3]
    %s61 = scalar_lea.vmem [#allocation6], 2
    %v62 = vld [vmem:[%s61] sm:$0x3]
    %s63 = scalar_lea.vmem [#allocation6], 4
    %v64 = vld [vmem:[%s63] sm:$0x3]
    %v65 = vld [vmem:[#allocation3] sm:$0x3]
    %v66 = vmul.f32 %v60, 0.114
    %v67 = vmul.f32 %v62, 0.587
    %v68 = vadd.f32 %v66, %v67
    %v69 = vmul.f32 %v64, 0.299
    %v70 = vadd.f32 %v68, %v69
    %vm71 = vcmp.gt.f32.partialorder %v70, 0.1
    %v72 = vsub.f32 %v65, 1.0
    %v73 = vand.u32 2147483647, %v72
    %v74 = vand.u32 2147483647, %v65
    %v75 = vsel %vm71, %v73, %v74
    %s76 = sadd.s32 0, 0
    %s77 = smul.u32 %s76, 256
    %v78 = vlaneseq
    %v79 = vshrl.u32 %v78, 7
    %v80 = vmul.u32 %v79, 128
    %v81 = vlaneseq
    %v82 = vand.u32 %v81, 127
    %v83 = vadd.s32 %v80, %v82
    %v84 = vstv %s77
    %v85 = vadd.s32 %v84, %v83
    %vm86 = vcmp.lt.s32.totalorder %v85, 256
    %v87 = vsel %vm86, %v75, 0.0
    %s88 = sld [smem:[#allocation2]]
    %vm89 = vcmask 1041408
    %v90 = vsel %vm89, %v87, 0.0
    %91 = vadd.xlane.f32.xlu0 %v90
    %v92 = vpop.xlane.xlu0 %91
    %v93 = vrot.slane %v92, 4
    %v94 = vadd.f32 %v92, %v93
    %v95 = vrot.slane %v94, 2
    %v96 = vadd.f32 %v94, %v95
    %v97 = vrot.slane %v96, 1
    %v98 = vadd.f32 %v96, %v97
    %s99 = vtos %v98
    %s100 = sadd.f32 %s88, %s99
    %s101 = scalar_lea.smem [#allocation2], 0
    %102 = sst [smem:[%s101]] %s100
    // Predicated region
    $region22: #{tpu_custom_call.1} parent=1 // pred_check
      %p103 = pneg %p54
    $region23: #{tpu_custom_call.1} parent=1 // pred_check_branch
      %105 = sbr.rel (%p103) target = $region25
    $region24: #{tpu_custom_call.1} parent=1 // pred_region
      %s106 = sld [smem:[#allocation2]]
      %s107 = scalar_lea.smem [#allocation8], 0
      %108 = sst [smem:[%s107]] %s106
    $region25: #{tpu_custom_call.1} parent=1 // pred_fallthru
      _
    // Predicated region
    $region26: #{tpu_custom_call.1} parent=1 // pred_check
      _
    $region27: #{tpu_custom_call.1} parent=1 // pred_check_branch
      %110 = sbr.rel (0) target = $region29
    $region28: #{tpu_custom_call.1} parent=1 // pred_region
      %s112 = ssub.s32 16, 16
      %113 = vsyncadd [#allocation5], %s112
      %116 = dma.smem_to_hbm [#allocation8], 16, %s2, [#allocation5]
    $region29: #{tpu_custom_call.1} parent=1 // pred_fallthru
      _
    // Predicated region
    $region30: #{tpu_custom_call.1} parent=1 // pred_check
      _
    $region31: #{tpu_custom_call.1} parent=1 // pred_check_branch
      %118 = sbr.rel (0) target = $region33
    $region32: #{tpu_custom_call.1} parent=1 // pred_region
      %119 = dma.done [#allocation5], 16
    $region33: #{tpu_custom_call.1} parent=1 // pred_fallthru
      _
    %120 = sfence
    %121 = vsyncpa [#allocation4], 1
    %122 = vsyncpa [#allocation7], 1
    %123 = vsyncpa [#allocation5], 1

</llo_original>
